<compile_context>
chip_gen: v7x
topology: tpu7x:2x2x1
jax: 0.10.0
libtpu: 0.0.40
codegen_flags: <defaults>
</compile_context>

<pallas_src>
import functools

import jax
import jax.numpy as jnp
from jax.experimental import pallas as pl
from jax.experimental.pallas import tpu as pltpu

C1 = 0.01 ** 2
C2 = 0.03 ** 2


def _ssim_kernel(x_ref, y_ref, o_ref, *, h_row_fixups: bool):
    # x_ref / y_ref / o_ref: (B, H, W) blocks of unpadded image planes.
    xb = x_ref[...].astype(jnp.float32)
    yb = y_ref[...].astype(jnp.float32)
    _, H, W = xb.shape

    # Lane-axis (W) boundary masks, built ONCE per block at (1, H, W) so the
    # mask cost does not scale with the planes-per-block batch B (the leading
    # dim broadcasts for free in the selects below).
    col_idx = jax.lax.broadcasted_iota(jnp.int32, (1, H, W), 2)
    col_first = col_idx == 0
    col_last = col_idx == W - 1

    if not h_row_fixups:
        # Fallback path only: sublane-axis masks for select-based reflection.
        row_idx = jax.lax.broadcasted_iota(jnp.int32, (1, H, W), 1)
        row_first = row_idx == 0
        row_last = row_idx == H - 1

    def sum3_w(a):
        # 3-tap reflection sum along W (lanes).  Column fix-ups would be
        # lane-misaligned, so boundary handling stays as two selects.
        prev = pltpu.roll(a, 1, 2)       # a[:, :, j-1]  (wraps at j == 0)
        nxt = pltpu.roll(a, W - 1, 2)    # a[:, :, j+1]  (wraps at j == W-1)
        left = jnp.where(col_first, nxt, prev)    # a[:, :, -1] -> a[:, :, 1]
        right = jnp.where(col_last, prev, nxt)    # a[:, :, W]  -> a[:, :, W-2]
        return a + left + right

    def sum3_h(a):
        # 3-tap reflection sum along H (sublanes).
        prev = pltpu.roll(a, 1, 1)       # a[:, i-1, :]  (wraps at i == 0)
        nxt = pltpu.roll(a, H - 1, 1)    # a[:, i+1, :]  (wraps at i == H-1)
        if h_row_fixups:
            # Wrap roll-sum, then fix only rows 0 and H-1 (reflection excludes
            # the edge pixel).  Touches 2 rows per plane instead of two
            # full-plane selects; row slices stay sublane-local (no lane work).
            s = a + prev + nxt
            row0 = s[:, 0:1, :] + (a[:, 1:2, :] - a[:, H - 1:H, :])
            rowL = s[:, H - 1:H, :] + (a[:, H - 2:H - 1, :] - a[:, 0:1, :])
            s = jax.lax.dynamic_update_slice(s, row0, (0, 0, 0))
            s = jax.lax.dynamic_update_slice(s, rowL, (0, H - 1, 0))
            return s
        top = jnp.where(row_first, nxt, prev)
        bot = jnp.where(row_last, prev, nxt)
        return a + top + bot

    def pool3x3(a):
        # Separable 3x3 average pool over the (virtually) reflection-padded
        # plane: 1x3 along lanes first, then 3x1 along sublanes.
        return sum3_h(sum3_w(a)) * (1.0 / 9.0)

    mu_x = pool3x3(xb)
    mu_y = pool3x3(yb)
    sigma_x = pool3x3(xb * xb) - mu_x * mu_x
    sigma_y = pool3x3(yb * yb) - mu_y * mu_y
    sigma_xy = pool3x3(xb * yb) - mu_x * mu_y

    ssim_n = (2.0 * mu_x * mu_y + C1) * (2.0 * sigma_xy + C2)
    ssim_d = (mu_x * mu_x + mu_y * mu_y + C1) * (sigma_x + sigma_y + C2)

    # Reciprocal on the EUP (idle otherwise) + one Newton step on the VPU to
    # recover ~1e-7 relative accuracy off the saturating VALU slot.
    r = pl.reciprocal(ssim_d, approx=True)
    r = r * (2.0 - ssim_d * r)

    out = jnp.clip((1.0 - ssim_n * r) * 0.5, 0.0, 1.0)
    o_ref[...] = out.astype(o_ref.dtype)


_ssim_kernel_fast = functools.partial(_ssim_kernel, h_row_fixups=True)
_ssim_kernel_safe = functools.partial(_ssim_kernel, h_row_fixups=False)


def _vmem_budget_bytes():
    """Generation-aware VMEM budget: at most half of physical VMEM
    (~64 MiB on 128 MiB v5e/v6e, ~32 MiB on 64 MiB v7x)."""
    cap = 64 * 1024 * 1024  # conservative fallback if the query fails
    try:
        cap = int(pltpu.get_tpu_info().vmem_capacity_bytes)
    except Exception:
        pass
    return max(16 * 1024 * 1024, min(cap // 2, 64 * 1024 * 1024))


def _per_plane_vmem_bytes(H, W, itemsize):
    # Real live-set model: 3 I/O planes, double-buffered by the pipeline,
    # plus ~20 f32 temporaries live during the compute of one block.
    return 3 * 2 * H * W * itemsize + 20 * 4 * H * W


def _pick_planes_per_block(P, H, W, itemsize, vmem_budget):
    """Planes per grid step: do NOT maximize — target ~2 MiB of input bytes per
    block and keep the grid >= 8 steps (>= 4 per v7x TensorCore) so the
    double-buffer has something to overlap."""
    plane_io = H * W * itemsize
    bmax_vmem = max(1, vmem_budget // _per_plane_vmem_bytes(H, W, itemsize))
    bmax_input = max(1, (2 * 1024 * 1024) // max(1, 2 * plane_io))
    bmax_grid = max(1, P // 8)
    bmax = min(bmax_vmem, bmax_input, bmax_grid, P)
    best = 1
    for b in range(1, int(bmax) + 1):
        if P % b == 0:
            best = b
    return best


def _ssim_ref(x, y):
    # Pure-JAX reference (same math as the PyTorch module). Also used as the
    # fallback path for planes too large for a single VMEM block.
    pad = ((0, 0), (0, 0), (1, 1), (1, 1))
    xp = jnp.pad(x, pad, mode="reflect")
    yp = jnp.pad(y, pad, mode="reflect")

    def pool(a):
        return jax.lax.reduce_window(
            a, 0.0, jax.lax.add, (1, 1, 3, 3), (1, 1, 1, 1), "VALID"
        ) / 9.0

    mu_x, mu_y = pool(xp), pool(yp)
    sigma_x = pool(xp * xp) - mu_x ** 2
    sigma_y = pool(yp * yp) - mu_y ** 2
    sigma_xy = pool(xp * yp) - mu_x * mu_y
    n = (2 * mu_x * mu_y + C1) * (2 * sigma_xy + C2)
    d = (mu_x ** 2 + mu_y ** 2 + C1) * (sigma_x + sigma_y + C2)
    return jnp.clip((1 - n / d) / 2, 0.0, 1.0)


def _make_call(kernel, P, B, H, W, dtype, vmem_budget):
    itemsize = jnp.dtype(dtype).itemsize
    cost = pl.CostEstimate(
        flops=70 * P * H * W,
        transcendentals=P * H * W,          # one EUP reciprocal per element
        bytes_accessed=3 * P * H * W * itemsize,
    )
    return pl.pallas_call(
        kernel,
        out_shape=jax.ShapeDtypeStruct((P, H, W), dtype),
        grid_spec=pltpu.PrefetchScalarGridSpec(
            num_scalar_prefetch=0,
            grid=(P // B,),
            in_specs=[
                pl.BlockSpec((B, H, W), lambda i: (i, 0, 0)),
                pl.BlockSpec((B, H, W), lambda i: (i, 0, 0)),
            ],
            out_specs=pl.BlockSpec((B, H, W), lambda i: (i, 0, 0)),
        ),
        compiler_params=pltpu.CompilerParams(
            dimension_semantics=("parallel",),
            vmem_limit_bytes=int(vmem_budget),
        ),
        cost_estimate=cost,
    )


def ssim_loss(x, y):
    """SSIM_Loss.forward equivalent. x, y: (N, C, H, W) arrays."""
    assert x.shape == y.shape and x.ndim == 4
    N, C, H, W = x.shape
    if H < 2 or W < 2:
        raise ValueError("ReflectionPad2d(1) requires H >= 2 and W >= 2")
    P = N * C
    itemsize = jnp.dtype(x.dtype).itemsize
    budget = _vmem_budget_bytes()

    if _per_plane_vmem_bytes(H, W, itemsize) > budget:
        # TODO(synk): row-strip tiling with a 1-row halo for planes whose live
        # set exceeds the per-generation VMEM budget (matters on v7x's 64 MiB);
        # route to the XLA path until then.
        return _ssim_ref(x, y)

    # NOTE: W maps to the 128-lane axis; W that is a multiple of 128 gives
    # lane-dense (unmasked) stores. Awkward/small W still runs correctly,
    # just further from roofline.
    x2 = x.reshape(P, H, W)   # free reshape; unpadded planes stream from HBM
    y2 = y.reshape(P, H, W)
    B = _pick_planes_per_block(P, H, W, itemsize, budget)

    try:
        out = _make_call(_ssim_kernel_fast, P, B, H, W, x.dtype, budget)(x2, y2)
    except Exception:
        # If this Mosaic version rejects value-level single-row updates, fall
        # back to the (slightly more VPU-heavy) select-based reflection kernel.
        out = _make_call(_ssim_kernel_safe, P, B, H, W, x.dtype, budget)(x2, y2)
    return out.reshape(N, C, H, W)


if __name__ == "__main__":
    key = jax.random.PRNGKey(0)
    kx, ky = jax.random.split(key)
    N, C, H, W = 2, 4, 16, 16
    x = jax.random.uniform(kx, (N, C, H, W), dtype=jnp.float32)
    y = jax.random.uniform(ky, (N, C, H, W), dtype=jnp.float32)

    out = jax.block_until_ready(ssim_loss(x, y))
    ref = jax.block_until_ready(_ssim_ref(x, y))

    assert out.shape == (N, C, H, W)
    err = float(jnp.max(jnp.abs(out.astype(jnp.float32) - ref)))
    assert err < 1e-5, f"max abs err {err}"
    print("KERNEL_OK")
</pallas_src>

<mosaic_0001>
module attributes {stable_mosaic.version = 11 : i64} {
  func.func @_ssim_kernel(%arg0: i32, %arg1: memref<1x16x16xf32, #tpu.memory_space<vmem>>, %arg2: memref<1x16x16xf32, #tpu.memory_space<vmem>>, %arg3: memref<1x16x16xf32, #tpu.memory_space<vmem>>) attributes {dimension_semantics = [#tpu.dimension_semantics<parallel>], iteration_bounds = array<i64: 8>, scalar_prefetch = 0 : i64, scratch_operands = 0 : i64, tpu.core_type = #tpu.core_type<tc>, window_params = [{transform_indices = @transform_0, window_bounds = array<i64: 1, 16, 16>}, {transform_indices = @transform_1, window_bounds = array<i64: 1, 16, 16>}, {transform_indices = @transform_2, window_bounds = array<i64: 1, 16, 16>}]} {
    %c0 = arith.constant 0 : index
    %c0_0 = arith.constant 0 : index
    %c0_1 = arith.constant 0 : index
    %0 = vector.load %arg1[%c0, %c0_0, %c0_1] : memref<1x16x16xf32, #tpu.memory_space<vmem>>, vector<1x16x16xf32>
    %c0_2 = arith.constant 0 : index
    %c0_3 = arith.constant 0 : index
    %c0_4 = arith.constant 0 : index
    %1 = vector.load %arg2[%c0_2, %c0_3, %c0_4] : memref<1x16x16xf32, #tpu.memory_space<vmem>>, vector<1x16x16xf32>
    %2 = tpu.iota {dimensions = array<i32: 2>} : vector<1x16x16xi32>
    %c0_i32 = arith.constant 0 : i32
    %3 = vector.broadcast %c0_i32 : i32 to vector<1x16x16xi32>
    %4 = arith.cmpi eq, %2, %3 : vector<1x16x16xi32>
    %c15_i32 = arith.constant 15 : i32
    %5 = vector.broadcast %c15_i32 : i32 to vector<1x16x16xi32>
    %6 = arith.cmpi eq, %2, %5 : vector<1x16x16xi32>
    %7 = tpu.iota {dimensions = array<i32: 1>} : vector<1x16x16xi32>
    %c0_i32_5 = arith.constant 0 : i32
    %8 = vector.broadcast %c0_i32_5 : i32 to vector<1x16x16xi32>
    %9 = arith.cmpi eq, %7, %8 : vector<1x16x16xi32>
    %c15_i32_6 = arith.constant 15 : i32
    %10 = vector.broadcast %c15_i32_6 : i32 to vector<1x16x16xi32>
    %11 = arith.cmpi eq, %7, %10 : vector<1x16x16xi32>
    %c1_i32 = arith.constant 1 : i32
    %12 = tpu.dynamic_rotate %0 by %c1_i32 dim 2 : vector<1x16x16xf32>, i32 -> vector<1x16x16xf32>
    %c15_i32_7 = arith.constant 15 : i32
    %13 = tpu.dynamic_rotate %0 by %c15_i32_7 dim 2 : vector<1x16x16xf32>, i32 -> vector<1x16x16xf32>
    %14 = arith.select %4, %13, %12 : vector<1x16x16xi1>, vector<1x16x16xf32>
    %15 = arith.select %6, %12, %13 : vector<1x16x16xi1>, vector<1x16x16xf32>
    %16 = arith.addf %0, %14 : vector<1x16x16xf32>
    %17 = arith.addf %16, %15 : vector<1x16x16xf32>
    %c1_i32_8 = arith.constant 1 : i32
    %18 = tpu.dynamic_rotate %17 by %c1_i32_8 dim 1 : vector<1x16x16xf32>, i32 -> vector<1x16x16xf32>
    %c15_i32_9 = arith.constant 15 : i32
    %19 = tpu.dynamic_rotate %17 by %c15_i32_9 dim 1 : vector<1x16x16xf32>, i32 -> vector<1x16x16xf32>
    %20 = arith.select %9, %19, %18 : vector<1x16x16xi1>, vector<1x16x16xf32>
    %21 = arith.select %11, %18, %19 : vector<1x16x16xi1>, vector<1x16x16xf32>
    %22 = arith.addf %17, %20 : vector<1x16x16xf32>
    %23 = arith.addf %22, %21 : vector<1x16x16xf32>
    %cst = arith.constant 0.111111112 : f32
    %24 = vector.broadcast %cst : f32 to vector<1x16x16xf32>
    %25 = arith.mulf %23, %24 : vector<1x16x16xf32>
    %c1_i32_10 = arith.constant 1 : i32
    %26 = tpu.dynamic_rotate %1 by %c1_i32_10 dim 2 : vector<1x16x16xf32>, i32 -> vector<1x16x16xf32>
    %c15_i32_11 = arith.constant 15 : i32
    %27 = tpu.dynamic_rotate %1 by %c15_i32_11 dim 2 : vector<1x16x16xf32>, i32 -> vector<1x16x16xf32>
    %28 = arith.select %4, %27, %26 : vector<1x16x16xi1>, vector<1x16x16xf32>
    %29 = arith.select %6, %26, %27 : vector<1x16x16xi1>, vector<1x16x16xf32>
    %30 = arith.addf %1, %28 : vector<1x16x16xf32>
    %31 = arith.addf %30, %29 : vector<1x16x16xf32>
    %c1_i32_12 = arith.constant 1 : i32
    %32 = tpu.dynamic_rotate %31 by %c1_i32_12 dim 1 : vector<1x16x16xf32>, i32 -> vector<1x16x16xf32>
    %c15_i32_13 = arith.constant 15 : i32
    %33 = tpu.dynamic_rotate %31 by %c15_i32_13 dim 1 : vector<1x16x16xf32>, i32 -> vector<1x16x16xf32>
    %34 = arith.select %9, %33, %32 : vector<1x16x16xi1>, vector<1x16x16xf32>
    %35 = arith.select %11, %32, %33 : vector<1x16x16xi1>, vector<1x16x16xf32>
    %36 = arith.addf %31, %34 : vector<1x16x16xf32>
    %37 = arith.addf %36, %35 : vector<1x16x16xf32>
    %cst_14 = arith.constant 0.111111112 : f32
    %38 = vector.broadcast %cst_14 : f32 to vector<1x16x16xf32>
    %39 = arith.mulf %37, %38 : vector<1x16x16xf32>
    %40 = arith.mulf %0, %0 : vector<1x16x16xf32>
    %c1_i32_15 = arith.constant 1 : i32
    %41 = tpu.dynamic_rotate %40 by %c1_i32_15 dim 2 : vector<1x16x16xf32>, i32 -> vector<1x16x16xf32>
    %c15_i32_16 = arith.constant 15 : i32
    %42 = tpu.dynamic_rotate %40 by %c15_i32_16 dim 2 : vector<1x16x16xf32>, i32 -> vector<1x16x16xf32>
    %43 = arith.select %4, %42, %41 : vector<1x16x16xi1>, vector<1x16x16xf32>
    %44 = arith.select %6, %41, %42 : vector<1x16x16xi1>, vector<1x16x16xf32>
    %45 = arith.addf %40, %43 : vector<1x16x16xf32>
    %46 = arith.addf %45, %44 : vector<1x16x16xf32>
    %c1_i32_17 = arith.constant 1 : i32
    %47 = tpu.dynamic_rotate %46 by %c1_i32_17 dim 1 : vector<1x16x16xf32>, i32 -> vector<1x16x16xf32>
    %c15_i32_18 = arith.constant 15 : i32
    %48 = tpu.dynamic_rotate %46 by %c15_i32_18 dim 1 : vector<1x16x16xf32>, i32 -> vector<1x16x16xf32>
    %49 = arith.select %9, %48, %47 : vector<1x16x16xi1>, vector<1x16x16xf32>
    %50 = arith.select %11, %47, %48 : vector<1x16x16xi1>, vector<1x16x16xf32>
    %51 = arith.addf %46, %49 : vector<1x16x16xf32>
    %52 = arith.addf %51, %50 : vector<1x16x16xf32>
    %cst_19 = arith.constant 0.111111112 : f32
    %53 = vector.broadcast %cst_19 : f32 to vector<1x16x16xf32>
    %54 = arith.mulf %52, %53 : vector<1x16x16xf32>
    %55 = arith.mulf %25, %25 : vector<1x16x16xf32>
    %56 = arith.subf %54, %55 : vector<1x16x16xf32>
    %57 = arith.mulf %1, %1 : vector<1x16x16xf32>
    %c1_i32_20 = arith.constant 1 : i32
    %58 = tpu.dynamic_rotate %57 by %c1_i32_20 dim 2 : vector<1x16x16xf32>, i32 -> vector<1x16x16xf32>
    %c15_i32_21 = arith.constant 15 : i32
    %59 = tpu.dynamic_rotate %57 by %c15_i32_21 dim 2 : vector<1x16x16xf32>, i32 -> vector<1x16x16xf32>
    %60 = arith.select %4, %59, %58 : vector<1x16x16xi1>, vector<1x16x16xf32>
    %61 = arith.select %6, %58, %59 : vector<1x16x16xi1>, vector<1x16x16xf32>
    %62 = arith.addf %57, %60 : vector<1x16x16xf32>
    %63 = arith.addf %62, %61 : vector<1x16x16xf32>
    %c1_i32_22 = arith.constant 1 : i32
    %64 = tpu.dynamic_rotate %63 by %c1_i32_22 dim 1 : vector<1x16x16xf32>, i32 -> vector<1x16x16xf32>
    %c15_i32_23 = arith.constant 15 : i32
    %65 = tpu.dynamic_rotate %63 by %c15_i32_23 dim 1 : vector<1x16x16xf32>, i32 -> vector<1x16x16xf32>
    %66 = arith.select %9, %65, %64 : vector<1x16x16xi1>, vector<1x16x16xf32>
    %67 = arith.select %11, %64, %65 : vector<1x16x16xi1>, vector<1x16x16xf32>
    %68 = arith.addf %63, %66 : vector<1x16x16xf32>
    %69 = arith.addf %68, %67 : vector<1x16x16xf32>
    %cst_24 = arith.constant 0.111111112 : f32
    %70 = vector.broadcast %cst_24 : f32 to vector<1x16x16xf32>
    %71 = arith.mulf %69, %70 : vector<1x16x16xf32>
    %72 = arith.mulf %39, %39 : vector<1x16x16xf32>
    %73 = arith.subf %71, %72 : vector<1x16x16xf32>
    %74 = arith.mulf %0, %1 : vector<1x16x16xf32>
    %c1_i32_25 = arith.constant 1 : i32
    %75 = tpu.dynamic_rotate %74 by %c1_i32_25 dim 2 : vector<1x16x16xf32>, i32 -> vector<1x16x16xf32>
    %c15_i32_26 = arith.constant 15 : i32
    %76 = tpu.dynamic_rotate %74 by %c15_i32_26 dim 2 : vector<1x16x16xf32>, i32 -> vector<1x16x16xf32>
    %77 = arith.select %4, %76, %75 : vector<1x16x16xi1>, vector<1x16x16xf32>
    %78 = arith.select %6, %75, %76 : vector<1x16x16xi1>, vector<1x16x16xf32>
    %79 = arith.addf %74, %77 : vector<1x16x16xf32>
    %80 = arith.addf %79, %78 : vector<1x16x16xf32>
    %c1_i32_27 = arith.constant 1 : i32
    %81 = tpu.dynamic_rotate %80 by %c1_i32_27 dim 1 : vector<1x16x16xf32>, i32 -> vector<1x16x16xf32>
    %c15_i32_28 = arith.constant 15 : i32
    %82 = tpu.dynamic_rotate %80 by %c15_i32_28 dim 1 : vector<1x16x16xf32>, i32 -> vector<1x16x16xf32>
    %83 = arith.select %9, %82, %81 : vector<1x16x16xi1>, vector<1x16x16xf32>
    %84 = arith.select %11, %81, %82 : vector<1x16x16xi1>, vector<1x16x16xf32>
    %85 = arith.addf %80, %83 : vector<1x16x16xf32>
    %86 = arith.addf %85, %84 : vector<1x16x16xf32>
    %cst_29 = arith.constant 0.111111112 : f32
    %87 = vector.broadcast %cst_29 : f32 to vector<1x16x16xf32>
    %88 = arith.mulf %86, %87 : vector<1x16x16xf32>
    %89 = arith.mulf %25, %39 : vector<1x16x16xf32>
    %90 = arith.subf %88, %89 : vector<1x16x16xf32>
    %cst_30 = arith.constant 2.000000e+00 : f32
    %91 = vector.broadcast %cst_30 : f32 to vector<1x16x16xf32>
    %92 = arith.mulf %91, %25 : vector<1x16x16xf32>
    %93 = arith.mulf %92, %39 : vector<1x16x16xf32>
    %cst_31 = arith.constant 9.99999974E-5 : f32
    %94 = vector.broadcast %cst_31 : f32 to vector<1x16x16xf32>
    %95 = arith.addf %93, %94 : vector<1x16x16xf32>
    %cst_32 = arith.constant 2.000000e+00 : f32
    %96 = vector.broadcast %cst_32 : f32 to vector<1x16x16xf32>
    %97 = arith.mulf %96, %90 : vector<1x16x16xf32>
    %cst_33 = arith.constant 8.99999984E-4 : f32
    %98 = vector.broadcast %cst_33 : f32 to vector<1x16x16xf32>
    %99 = arith.addf %97, %98 : vector<1x16x16xf32>
    %100 = arith.mulf %95, %99 : vector<1x16x16xf32>
    %101 = arith.mulf %25, %25 : vector<1x16x16xf32>
    %102 = arith.mulf %39, %39 : vector<1x16x16xf32>
    %103 = arith.addf %101, %102 : vector<1x16x16xf32>
    %cst_34 = arith.constant 9.99999974E-5 : f32
    %104 = vector.broadcast %cst_34 : f32 to vector<1x16x16xf32>
    %105 = arith.addf %103, %104 : vector<1x16x16xf32>
    %106 = arith.addf %56, %73 : vector<1x16x16xf32>
    %cst_35 = arith.constant 8.99999984E-4 : f32
    %107 = vector.broadcast %cst_35 : f32 to vector<1x16x16xf32>
    %108 = arith.addf %106, %107 : vector<1x16x16xf32>
    %109 = arith.mulf %105, %108 : vector<1x16x16xf32>
    %110 = tpu.reciprocal %109 {approx = true} : vector<1x16x16xf32> -> vector<1x16x16xf32>
    %111 = arith.mulf %109, %110 : vector<1x16x16xf32>
    %cst_36 = arith.constant 2.000000e+00 : f32
    %112 = vector.broadcast %cst_36 : f32 to vector<1x16x16xf32>
    %113 = arith.subf %112, %111 : vector<1x16x16xf32>
    %114 = arith.mulf %110, %113 : vector<1x16x16xf32>
    %115 = arith.mulf %100, %114 : vector<1x16x16xf32>
    %cst_37 = arith.constant 1.000000e+00 : f32
    %116 = vector.broadcast %cst_37 : f32 to vector<1x16x16xf32>
    %117 = arith.subf %116, %115 : vector<1x16x16xf32>
    %cst_38 = arith.constant 5.000000e-01 : f32
    %118 = vector.broadcast %cst_38 : f32 to vector<1x16x16xf32>
    %119 = arith.mulf %117, %118 : vector<1x16x16xf32>
    %cst_39 = arith.constant 0.000000e+00 : f32
    %cst_40 = arith.constant 1.000000e+00 : f32
    %120 = vector.broadcast %cst_39 : f32 to vector<1x16x16xf32>
    %121 = arith.maximumf %120, %119 : vector<1x16x16xf32>
    %122 = vector.broadcast %cst_40 : f32 to vector<1x16x16xf32>
    %123 = arith.minimumf %122, %121 : vector<1x16x16xf32>
    %c0_41 = arith.constant 0 : index
    %c0_42 = arith.constant 0 : index
    %c0_43 = arith.constant 0 : index
    %124 = vector.load %arg3[%c0_41, %c0_42, %c0_43] : memref<1x16x16xf32, #tpu.memory_space<vmem>>, vector<1x16x16xf32>
    tpu.vector_store %arg3[%c0_41, %c0_42, %c0_43], %123 {strides = array<i32>} : memref<1x16x16xf32, #tpu.memory_space<vmem>>, vector<1x16x16xf32>,
    return
  }
  func.func @transform_0(%arg0: i32) -> (i32, i32, i32) {
    %c0_i32 = arith.constant 0 : i32
    %c0_i32_0 = arith.constant 0 : i32
    %c0_i32_1 = arith.constant 0 : i32
    return %arg0, %c0_i32, %c0_i32_0 : i32, i32, i32
  }
  func.func @transform_1(%arg0: i32) -> (i32, i32, i32) {
    %c0_i32 = arith.constant 0 : i32
    %c0_i32_0 = arith.constant 0 : i32
    %c0_i32_1 = arith.constant 0 : i32
    return %arg0, %c0_i32, %c0_i32_0 : i32, i32, i32
  }
  func.func @transform_2(%arg0: i32) -> (i32, i32, i32) {
    %c0_i32 = arith.constant 0 : i32
    %c0_i32_0 = arith.constant 0 : i32
    %c0_i32_1 = arith.constant 0 : i32
    return %arg0, %c0_i32, %c0_i32_0 : i32, i32, i32
  }
}

</mosaic_0001>

<llo_original>
// kernel: tpu_custom_call.1
$region0: #{tpu_custom_call.1}
  #allocation0 [shape = 'u32[]', space=smem, size = 0x4, offset = 0x4, fixed_abs, tag = 'smem constant byte address 0x4 - core index']
  #allocation1 [shape = 'u32[144,128]{1,0:T(1,128)}', space=vmem, size = 0x12000, scoped, tag = 'internal scratch']
  %s0 = inlined_call_operand.hbm [shape: f32[8,16,16], index: 0, kind: input, shape index: {}]
  %s1 = inlined_call_operand.hbm [shape: f32[8,16,16], index: 1, kind: input, shape index: {}]
  %s2 = inlined_call_operand.hbm [shape: f32[8,16,16], index: 2, kind: output, shape index: {}]
  %s3 = sld [smem:[#allocation0]]
  $region49: #{tpu_custom_call.1} parent=0
    _
  %s5 = ssub.s32 1, %s3
  %s6 = scalar_select 0, %s5, %s3
  $region1: #{tpu_custom_call.1} parent=0
    #allocation2 [shape = 'u8[16384]{0}', space=vmem, size = 0x4000, scoped, tag = 'input window, operand 0']
    #allocation3 [shape = 's32[2]{0}', space=sflag, size = 0x8, scoped, tag = 'scoped memory for tpu_custom_call.1']
    #allocation4 [shape = 's32[2]{0}', space=sflag, size = 0x8, scoped, tag = 'scoped memory for tpu_custom_call.1']
    #allocation5 [shape = 'u8[16384]{0}', space=vmem, size = 0x4000, scoped, tag = 'input window, operand 1']
    #allocation6 [shape = 's32[2]{0}', space=sflag, size = 0x8, scoped, tag = 'scoped memory for tpu_custom_call.1']
    #allocation7 [shape = 'u8[16384]{0}', space=vmem, size = 0x4000, scoped, tag = 'output window, operand 0']
    %7 = vsyncpa [#allocation3], 0
    %s8 = scalar_lea.sflag [#allocation3], 1
    %9 = vsyncpa %s8, 0
    %10 = vsyncpa [#allocation6], 0
    %s11 = scalar_lea.sflag [#allocation6], 1
    %12 = vsyncpa %s11, 0
    %13 = vsyncpa [#allocation4], 0
    %s14 = scalar_lea.sflag [#allocation4], 1
    %15 = vsyncpa %s14, 0
    loop: start=0, step=1, limit=10
    $region2: #{tpu_custom_call.1} parent=1 // loop_pre_header
      _
    $region3: #{tpu_custom_call.1} parent=1 // loop_header
      %s17 = sphi 0, %s21
      %p18 = scmp.ge.s32.totalorder %s17, 10
      %s27 = sphi 0, %s29
      %s30 = sphi 0, %s27
      %s31 = sphi 0, %s30
      %s47 = sphi 0, %s31
      %s53 = sphi 0, %s55
      %s56 = sphi 0, %s53
      %s57 = sphi 0, %s56
      %s73 = sphi 0, %s57
      %s79 = sphi 0, %s81
      %s82 = sphi 0, %s79
      %s83 = sphi 0, %s82
      %s99 = sphi 0, %s83
    $region4: #{tpu_custom_call.1} parent=1 // loop_header_branch
      %20 = sbr.rel (%p18) target = $region8
    $region5: #{tpu_custom_call.1} parent=1 // loop_body
      %s22 = ssub.s32 %s17, 1
      %s23 = ssub.s32 %s17, 2
      %s24 = sadd.s32 %s17, 1
      %s25 = ssub.s32 %s17, %s24
      %p26 = scmp.eq.s32.totalorder %s25, 0
      %s28 = sadd.s32 %s27, 1
      %s29 = scalar_select %p26, %s27, %s28
      %p32 = pneg %p26
      %p33 = scmp.eq.s32.totalorder %s17, 7
      %p34 = por %p32, %p33
      %p35 = scmp.ne.s32.totalorder %s27, %s30
      %p36 = scmp.eq.s32.totalorder %s17, 0
      %p37 = por %p35, %p36
      %p38 = scmp.ne.s32.totalorder %s27, %s30
      %p39 = scmp.eq.s32.totalorder %s22, 7
      %p40 = por %p38, %p39
      %p41 = scmp.ne.s32.totalorder %s30, %s31
      %p42 = scmp.eq.s32.totalorder %s22, 0
      %p43 = por %p41, %p42
      %p44 = scmp.ne.s32.totalorder %s30, %s31
      %p45 = scmp.eq.s32.totalorder %s23, 7
      %p46 = por %p44, %p45
      %p48 = scmp.ne.s32.totalorder %s31, %s47
      %p49 = scmp.eq.s32.totalorder %s23, 0
      %p50 = por %p48, %p49
      %s51 = ssub.s32 %s17, %s24
      %p52 = scmp.eq.s32.totalorder %s51, 0
      %s54 = sadd.s32 %s53, 1
      %s55 = scalar_select %p52, %s53, %s54
      %p58 = pneg %p52
      %p59 = scmp.eq.s32.totalorder %s17, 7
      %p60 = por %p58, %p59
      %p61 = scmp.ne.s32.totalorder %s53, %s56
      %p62 = scmp.eq.s32.totalorder %s17, 0
      %p63 = por %p61, %p62
      %p64 = scmp.ne.s32.totalorder %s53, %s56
      %p65 = scmp.eq.s32.totalorder %s22, 7
      %p66 = por %p64, %p65
      %p67 = scmp.ne.s32.totalorder %s56, %s57
      %p68 = scmp.eq.s32.totalorder %s22, 0
      %p69 = por %p67, %p68
      %p70 = scmp.ne.s32.totalorder %s56, %s57
      %p71 = scmp.eq.s32.totalorder %s23, 7
      %p72 = por %p70, %p71
      %p74 = scmp.ne.s32.totalorder %s57, %s73
      %p75 = scmp.eq.s32.totalorder %s23, 0
      %p76 = por %p74, %p75
      %s77 = ssub.s32 %s17, %s24
      %p78 = scmp.eq.s32.totalorder %s77, 0
      %s80 = sadd.s32 %s79, 1
      %s81 = scalar_select %p78, %s79, %s80
      %p84 = pneg %p78
      %p85 = scmp.eq.s32.totalorder %s17, 7
      %p86 = por %p84, %p85
      %p87 = scmp.ne.s32.totalorder %s79, %s82
      %p88 = scmp.eq.s32.totalorder %s17, 0
      %p89 = por %p87, %p88
      %p90 = scmp.ne.s32.totalorder %s79, %s82
      %p91 = scmp.eq.s32.totalorder %s22, 7
      %p92 = por %p90, %p91
      %p93 = scmp.ne.s32.totalorder %s82, %s83
      %p94 = scmp.eq.s32.totalorder %s22, 0
      %p95 = por %p93, %p94
      %p96 = scmp.ne.s32.totalorder %s82, %s83
      %p97 = scmp.eq.s32.totalorder %s23, 7
      %p98 = por %p96, %p97
      %p100 = scmp.ne.s32.totalorder %s83, %s99
      %p101 = scmp.eq.s32.totalorder %s23, 0
      %p102 = por %p100, %p101
      %p103 = scmp.le.s32.totalorder 1, %s17
      %p104 = scmp.lt.s32.totalorder %s17, 9
      %p105 = pnand %p103, %p104
      %p106 = pneg %p105
      // Predicated region
      $region9: #{tpu_custom_call.1} parent=5 // pred_check
        _
      $region10: #{tpu_custom_call.1} parent=5 // pred_check_branch
        %108 = sbr.rel (%p105) target = $region12
      $region11: #{tpu_custom_call.1} parent=5 // pred_region
        %s109 = ssub.s32 %s17, 1
      $region12: #{tpu_custom_call.1} parent=5 // pred_fallthru
        _
      %p110 = scmp.lt.s32.totalorder %s17, 8
      // Predicated region
      $region13: #{tpu_custom_call.1} parent=5 // pred_check
        %p111 = pneg %p110
      $region14: #{tpu_custom_call.1} parent=5 // pred_check_branch
        %113 = sbr.rel (%p111) target = $region16
      $region15: #{tpu_custom_call.1} parent=5 // pred_region
        // Predicated region
        $region17: #{tpu_custom_call.1} parent=15 // pred_check
          %p114 = pneg %p37
        $region18: #{tpu_custom_call.1} parent=15 // pred_check_branch
          %116 = sbr.rel (%p114) target = $region20
        $region19: #{tpu_custom_call.1} parent=15 // pred_region
          %s117 = sand.u32 %s27, 1
          %s118 = scalar_lea.sflag [#allocation3], %s117
          %s119 = sand.u32 %s27, 1
          %s120 = smul.addr %s119, 16
          %s121 = scalar_lea.vmem [#allocation2], %s120
          %s123 = ssub.s32 256, 256
          %124 = vsyncadd %s118, %s123
          %s125 = smul.addr %s17, 2
          %s126 = smul.addr %s125, 128
          %s127 = scalar_lea.hbm %s0, %s126
          %s128 = sshll.u32 %s121, 4
          %s129 = int_to_ptr.vmem [resolvable:$true] %s128
          %134 = dma.hbm_to_vmem [thread:$0]  %s127, 256, %s129, %s118, 128, 128, 8
        $region20: #{tpu_custom_call.1} parent=15 // pred_fallthru
          _
        // Predicated region
        $region21: #{tpu_custom_call.1} parent=15 // pred_check
          %p135 = pneg %p63
        $region22: #{tpu_custom_call.1} parent=15 // pred_check_branch
          %137 = sbr.rel (%p135) target = $region24
        $region23: #{tpu_custom_call.1} parent=15 // pred_region
          %s138 = sand.u32 %s53, 1
          %s139 = scalar_lea.sflag [#allocation6], %s138
          %s140 = sand.u32 %s53, 1
          %s141 = smul.addr %s140, 16
          %s142 = scalar_lea.vmem [#allocation5], %s141
          %s144 = ssub.s32 256, 256
          %145 = vsyncadd %s139, %s144
          %s146 = smul.addr %s17, 2
          %s147 = smul.addr %s146, 128
          %s148 = scalar_lea.hbm %s1, %s147
          %s149 = sshll.u32 %s142, 4
          %s150 = int_to_ptr.vmem [resolvable:$true] %s149
          %155 = dma.hbm_to_vmem [thread:$0]  %s148, 256, %s150, %s139, 128, 128, 8
        $region24: #{tpu_custom_call.1} parent=15 // pred_fallthru
          _
      $region16: #{tpu_custom_call.1} parent=5 // pred_fallthru
        _
      %p156 = scmp.le.s32.totalorder 1, %s17
      %p157 = scmp.lt.s32.totalorder %s17, 9
      %p158 = pnand %p156, %p157
      %p159 = pneg %p158
      // Predicated region
      $region25: #{tpu_custom_call.1} parent=5 // pred_check
        _
      $region26: #{tpu_custom_call.1} parent=5 // pred_check_branch
        %161 = sbr.rel (%p158) target = $region28
      $region27: #{tpu_custom_call.1} parent=5 // pred_region
        %s162 = ssub.s32 %s17, 1
        %s163 = sand.u32 %s30, 1
        %s164 = scalar_lea.sflag [#allocation3], %s163
        %s165 = sand.u32 %s30, 1
        %s166 = smul.addr %s165, 16
        %s167 = scalar_lea.vmem [#allocation2], %s166
        // Predicated region
        $region29: #{tpu_custom_call.1} parent=27 // pred_check
          %p168 = pneg %p43
        $region30: #{tpu_custom_call.1} parent=27 // pred_check_branch
          %170 = sbr.rel (%p168) target = $region32
        $region31: #{tpu_custom_call.1} parent=27 // pred_region
          %171 = dma.done %s164, 256
        $region32: #{tpu_custom_call.1} parent=27 // pred_fallthru
          _
        %s172 = sand.u32 %s56, 1
        %s173 = scalar_lea.sflag [#allocation6], %s172
        %s174 = sand.u32 %s56, 1
        %s175 = smul.addr %s174, 16
        %s176 = scalar_lea.vmem [#allocation5], %s175
        // Predicated region
        $region33: #{tpu_custom_call.1} parent=27 // pred_check
          %p177 = pneg %p69
        $region34: #{tpu_custom_call.1} parent=27 // pred_check_branch
          %179 = sbr.rel (%p177) target = $region36
        $region35: #{tpu_custom_call.1} parent=27 // pred_region
          %180 = dma.done %s173, 256
        $region36: #{tpu_custom_call.1} parent=27 // pred_fallthru
          _
        %s181 = sand.u32 %s30, 1
        %s182 = scalar_lea.sflag [#allocation3], %s181
        %s183 = sand.u32 %s30, 1
        %s184 = smul.addr %s183, 16
        %s185 = scalar_lea.vmem [#allocation2], %s184
        %p186 = pneg %p43
        %p187 = pneg %p40
        %s188 = sand.u32 %s56, 1
        %s189 = scalar_lea.sflag [#allocation6], %s188
        %s190 = sand.u32 %s56, 1
        %s191 = smul.addr %s190, 16
        %s192 = scalar_lea.vmem [#allocation5], %s191
        %p193 = pneg %p69
        %p194 = pneg %p66
        %p195 = pneg %p95
        %p196 = pneg %p92
        %s197 = sand.u32 %s82, 1
        %s198 = scalar_lea.sflag [#allocation4], %s197
        %s199 = sand.u32 %s82, 1
        %s200 = smul.addr %s199, 16
        %s201 = scalar_lea.vmem [#allocation7], %s200
        %v202 = vld [vmem:[%s167] sm:$0xff]
        %v203 = vld [vmem:[%s167 + $0x8] sm:$0xff]
        %v204 = vld [vmem:[%s176] sm:$0xff]
        %v205 = vld [vmem:[%s176 + $0x8] sm:$0xff]
        %v206 = vlaneseq
        %v207 = vand.u32 %v206, 127
        %vm208 = vcmp.eq.s32.totalorder %v207, 0
        %vm209 = vcmp.eq.s32.totalorder %v207, 15
        %v210 = vlaneseq
        %v211 = vshrl.u32 %v210, 7
        %v212 = vadd.s32 %v211, 8
        %vm213 = vcmp.eq.s32.totalorder %v211, 0
        %vm214 = vcmp.eq.s32.totalorder %v212, 0
        %vm215 = vcmp.eq.s32.totalorder %v211, 15
        %vm216 = vcmp.eq.s32.totalorder %v212, 15
        %vm217 = vcmask 1047680
        %218 = vrot.lane.b32.xlu0 %v202, 16
        %v219 = vpop.permute.xlu0 %218
        %v220 = vsel %vm217, %v219, %v202
        %221 = vrot.lane.b32.xlu0 %v203, 16
        %v222 = vpop.permute.xlu0 %221
        %v223 = vsel %vm217, %v222, %v203
        %224 = vrot.lane.b32.xlu0 %v220, 16
        %v225 = vpop.permute.xlu0 %224
        %226 = vrot.lane.b32.xlu0 %v223, 16
        %v227 = vpop.permute.xlu0 %226
        %v228 = vsel %vm217, %v225, %v202
        %v229 = vsel %vm217, %v227, %v203
        %232 = vrot.lane.b32.xlu0 %v228, 127
        %v233 = vpop.permute.xlu0 %232
        %234 = vrot.lane.b32.xlu0 %v229, 127
        %v235 = vpop.permute.xlu0 %234
        %238 = vrot.lane.b32.xlu0 %v228, 113
        %v239 = vpop.permute.xlu0 %238
        %240 = vrot.lane.b32.xlu0 %v229, 113
        %v241 = vpop.permute.xlu0 %240
        %v244 = vsel %vm208, %v233, %v239
        %v245 = vsel %vm208, %v235, %v241
        %v246 = vsel %vm209, %v239, %v233
        %v247 = vsel %vm209, %v241, %v235
        %v248 = vadd.f32 %v202, %v244
        %v249 = vadd.f32 %v203, %v245
        %v250 = vadd.f32 %v248, %v246
        %v251 = vadd.f32 %v249, %v247
        %v252 = vrot.slane %v250, 7
        %v253 = vrot.slane %v251, 7
        %vm254 = vcmp.lt.s32.totalorder %v211, 1
        %v255 = vsel %vm254, %v252, %v253
        %v256 = vsel %vm254, %v253, %v252
        %v257 = vrot.slane %v250, 1
        %v258 = vrot.slane %v251, 1
        %vm259 = vcmp.lt.s32.totalorder %v211, 7
        %v260 = vsel %vm259, %v257, %v258
        %v261 = vsel %vm259, %v258, %v257
        %v262 = vsel %vm213, %v260, %v256
        %v263 = vsel %vm214, %v261, %v255
        %v264 = vsel %vm215, %v256, %v260
        %v265 = vsel %vm216, %v255, %v261
        %v266 = vadd.f32 %v250, %v262
        %v267 = vadd.f32 %v251, %v263
        %v268 = vadd.f32 %v266, %v264
        %v269 = vadd.f32 %v267, %v265
        %v270 = vmul.f32 %v268, 0.11111111
        %v271 = vmul.f32 %v269, 0.11111111
        %272 = vrot.lane.b32.xlu0 %v204, 16
        %v273 = vpop.permute.xlu0 %272
        %v274 = vsel %vm217, %v273, %v204
        %275 = vrot.lane.b32.xlu0 %v205, 16
        %v276 = vpop.permute.xlu0 %275
        %v277 = vsel %vm217, %v276, %v205
        %278 = vrot.lane.b32.xlu0 %v274, 16
        %v279 = vpop.permute.xlu0 %278
        %280 = vrot.lane.b32.xlu0 %v277, 16
        %v281 = vpop.permute.xlu0 %280
        %v282 = vsel %vm217, %v279, %v204
        %v283 = vsel %vm217, %v281, %v205
        %286 = vrot.lane.b32.xlu0 %v282, 127
        %v287 = vpop.permute.xlu0 %286
        %288 = vrot.lane.b32.xlu0 %v283, 127
        %v289 = vpop.permute.xlu0 %288
        %292 = vrot.lane.b32.xlu0 %v282, 113
        %v293 = vpop.permute.xlu0 %292
        %294 = vrot.lane.b32.xlu0 %v283, 113
        %v295 = vpop.permute.xlu0 %294
        %v298 = vsel %vm208, %v287, %v293
        %v299 = vsel %vm208, %v289, %v295
        %v300 = vsel %vm209, %v293, %v287
        %v301 = vsel %vm209, %v295, %v289
        %v302 = vadd.f32 %v204, %v298
        %v303 = vadd.f32 %v205, %v299
        %v304 = vadd.f32 %v302, %v300
        %v305 = vadd.f32 %v303, %v301
        %v306 = vrot.slane %v304, 7
        %v307 = vrot.slane %v305, 7
        %v308 = vsel %vm254, %v306, %v307
        %v309 = vsel %vm254, %v307, %v306
        %v310 = vrot.slane %v304, 1
        %v311 = vrot.slane %v305, 1
        %v312 = vsel %vm259, %v310, %v311
        %v313 = vsel %vm259, %v311, %v310
        %v314 = vsel %vm213, %v312, %v309
        %v315 = vsel %vm214, %v313, %v308
        %v316 = vsel %vm215, %v309, %v312
        %v317 = vsel %vm216, %v308, %v313
        %v318 = vadd.f32 %v304, %v314
        %v319 = vadd.f32 %v305, %v315
        %v320 = vadd.f32 %v318, %v316
        %v321 = vadd.f32 %v319, %v317
        %v322 = vmul.f32 %v320, 0.11111111
        %v323 = vmul.f32 %v321, 0.11111111
        %v324 = vmul.f32 %v202, %v202
        %v325 = vmul.f32 %v203, %v203
        %326 = vrot.lane.b32.xlu0 %v324, 16
        %v327 = vpop.permute.xlu0 %326
        %v328 = vsel %vm217, %v327, %v324
        %329 = vrot.lane.b32.xlu0 %v325, 16
        %v330 = vpop.permute.xlu0 %329
        %v331 = vsel %vm217, %v330, %v325
        %332 = vrot.lane.b32.xlu0 %v328, 16
        %v333 = vpop.permute.xlu0 %332
        %334 = vrot.lane.b32.xlu0 %v331, 16
        %v335 = vpop.permute.xlu0 %334
        %v336 = vsel %vm217, %v333, %v324
        %v337 = vsel %vm217, %v335, %v325
        %340 = vrot.lane.b32.xlu0 %v336, 127
        %v341 = vpop.permute.xlu0 %340
        %342 = vrot.lane.b32.xlu0 %v337, 127
        %v343 = vpop.permute.xlu0 %342
        %346 = vrot.lane.b32.xlu0 %v336, 113
        %v347 = vpop.permute.xlu0 %346
        %348 = vrot.lane.b32.xlu0 %v337, 113
        %v349 = vpop.permute.xlu0 %348
        %v352 = vsel %vm208, %v341, %v347
        %v353 = vsel %vm208, %v343, %v349
        %v354 = vsel %vm209, %v347, %v341
        %v355 = vsel %vm209, %v349, %v343
        %v356 = vadd.f32 %v324, %v352
        %v357 = vadd.f32 %v325, %v353
        %v358 = vadd.f32 %v356, %v354
        %v359 = vadd.f32 %v357, %v355
        %v360 = vrot.slane %v358, 7
        %v361 = vrot.slane %v359, 7
        %v362 = vsel %vm254, %v360, %v361
        %v363 = vsel %vm254, %v361, %v360
        %v364 = vrot.slane %v358, 1
        %v365 = vrot.slane %v359, 1
        %v366 = vsel %vm259, %v364, %v365
        %v367 = vsel %vm259, %v365, %v364
        %v368 = vsel %vm213, %v366, %v363
        %v369 = vsel %vm214, %v367, %v362
        %v370 = vsel %vm215, %v363, %v366
        %v371 = vsel %vm216, %v362, %v367
        %v372 = vadd.f32 %v358, %v368
        %v373 = vadd.f32 %v359, %v369
        %v374 = vadd.f32 %v372, %v370
        %v375 = vadd.f32 %v373, %v371
        %v376 = vmul.f32 %v374, 0.11111111
        %v377 = vmul.f32 %v375, 0.11111111
        %v378 = vmul.f32 %v270, %v270
        %v379 = vmul.f32 %v271, %v271
        %v380 = vsub.f32 %v376, %v378
        %v381 = vsub.f32 %v377, %v379
        %v382 = vmul.f32 %v204, %v204
        %v383 = vmul.f32 %v205, %v205
        %384 = vrot.lane.b32.xlu0 %v382, 16
        %v385 = vpop.permute.xlu0 %384
        %v386 = vsel %vm217, %v385, %v382
        %387 = vrot.lane.b32.xlu0 %v383, 16
        %v388 = vpop.permute.xlu0 %387
        %v389 = vsel %vm217, %v388, %v383
        %390 = vrot.lane.b32.xlu0 %v386, 16
        %v391 = vpop.permute.xlu0 %390
        %392 = vrot.lane.b32.xlu0 %v389, 16
        %v393 = vpop.permute.xlu0 %392
        %v394 = vsel %vm217, %v391, %v382
        %v395 = vsel %vm217, %v393, %v383
        %398 = vrot.lane.b32.xlu0 %v394, 127
        %v399 = vpop.permute.xlu0 %398
        %400 = vrot.lane.b32.xlu0 %v395, 127
        %v401 = vpop.permute.xlu0 %400
        %404 = vrot.lane.b32.xlu0 %v394, 113
        %v405 = vpop.permute.xlu0 %404
        %406 = vrot.lane.b32.xlu0 %v395, 113
        %v407 = vpop.permute.xlu0 %406
        %v410 = vsel %vm208, %v399, %v405
        %v411 = vsel %vm208, %v401, %v407
        %v412 = vsel %vm209, %v405, %v399
        %v413 = vsel %vm209, %v407, %v401
        %v414 = vadd.f32 %v382, %v410
        %v415 = vadd.f32 %v383, %v411
        %v416 = vadd.f32 %v414, %v412
        %v417 = vadd.f32 %v415, %v413
        %v418 = vrot.slane %v416, 7
        %v419 = vrot.slane %v417, 7
        %v420 = vsel %vm254, %v418, %v419
        %v421 = vsel %vm254, %v419, %v418
        %v422 = vrot.slane %v416, 1
        %v423 = vrot.slane %v417, 1
        %v424 = vsel %vm259, %v422, %v423
        %v425 = vsel %vm259, %v423, %v422
        %v426 = vsel %vm213, %v424, %v421
        %v427 = vsel %vm214, %v425, %v420
        %v428 = vsel %vm215, %v421, %v424
        %v429 = vsel %vm216, %v420, %v425
        %v430 = vadd.f32 %v416, %v426
        %v431 = vadd.f32 %v417, %v427
        %v432 = vadd.f32 %v430, %v428
        %v433 = vadd.f32 %v431, %v429
        %v434 = vmul.f32 %v432, 0.11111111
        %v435 = vmul.f32 %v433, 0.11111111
        %v436 = vmul.f32 %v322, %v322
        %v437 = vmul.f32 %v323, %v323
        %v438 = vsub.f32 %v434, %v436
        %v439 = vsub.f32 %v435, %v437
        %v440 = vmul.f32 %v202, %v204
        %v441 = vmul.f32 %v203, %v205
        %442 = vrot.lane.b32.xlu0 %v440, 16
        %v443 = vpop.permute.xlu0 %442
        %v444 = vsel %vm217, %v443, %v440
        %445 = vrot.lane.b32.xlu0 %v441, 16
        %v446 = vpop.permute.xlu0 %445
        %v447 = vsel %vm217, %v446, %v441
        %448 = vrot.lane.b32.xlu0 %v444, 16
        %v449 = vpop.permute.xlu0 %448
        %450 = vrot.lane.b32.xlu0 %v447, 16
        %v451 = vpop.permute.xlu0 %450
        %v452 = vsel %vm217, %v449, %v440
        %v453 = vsel %vm217, %v451, %v441
        %456 = vrot.lane.b32.xlu0 %v452, 127
        %v457 = vpop.permute.xlu0 %456
        %458 = vrot.lane.b32.xlu0 %v453, 127
        %v459 = vpop.permute.xlu0 %458
        %462 = vrot.lane.b32.xlu0 %v452, 113
        %v463 = vpop.permute.xlu0 %462
        %464 = vrot.lane.b32.xlu0 %v453, 113
        %v465 = vpop.permute.xlu0 %464
        %v468 = vsel %vm208, %v457, %v463
        %v469 = vsel %vm208, %v459, %v465
        %v470 = vsel %vm209, %v463, %v457
        %v471 = vsel %vm209, %v465, %v459
        %v472 = vadd.f32 %v440, %v468
        %v473 = vadd.f32 %v441, %v469
        %v474 = vadd.f32 %v472, %v470
        %v475 = vadd.f32 %v473, %v471
        %v476 = vrot.slane %v474, 7
        %v477 = vrot.slane %v475, 7
        %v478 = vsel %vm254, %v476, %v477
        %v479 = vsel %vm254, %v477, %v476
        %v480 = vrot.slane %v474, 1
        %v481 = vrot.slane %v475, 1
        %v482 = vsel %vm259, %v480, %v481
        %v483 = vsel %vm259, %v481, %v480
        %v484 = vsel %vm213, %v482, %v479
        %v485 = vsel %vm214, %v483, %v478
        %v486 = vsel %vm215, %v479, %v482
        %v487 = vsel %vm216, %v478, %v483
        %v488 = vadd.f32 %v474, %v484
        %v489 = vadd.f32 %v475, %v485
        %v490 = vadd.f32 %v488, %v486
        %v491 = vadd.f32 %v489, %v487
        %v492 = vmul.f32 %v490, 0.11111111
        %v493 = vmul.f32 %v491, 0.11111111
        %v494 = vmul.f32 %v270, %v322
        %v495 = vmul.f32 %v271, %v323
        %v496 = vsub.f32 %v492, %v494
        %v497 = vsub.f32 %v493, %v495
        %v498 = vmul.f32 %v270, 2.0
        %v499 = vmul.f32 %v271, 2.0
        %v500 = vmul.f32 %v498, %v322
        %v501 = vmul.f32 %v499, %v323
        %v502 = vadd.f32 %v500, 0.0001
        %v503 = vadd.f32 %v501, 0.0001
        %v504 = vmul.f32 %v496, 2.0
        %v505 = vmul.f32 %v497, 2.0
        %v506 = vadd.f32 %v504, 0.0009
        %v507 = vadd.f32 %v505, 0.0009
        %v508 = vmul.f32 %v502, %v506
        %v509 = vmul.f32 %v503, %v507
        %v510 = vadd.f32 %v378, %v436
        %v511 = vadd.f32 %v379, %v437
        %v512 = vadd.f32 %v510, 0.0001
        %v513 = vadd.f32 %v511, 0.0001
        %v514 = vadd.f32 %v380, %v438
        %v515 = vadd.f32 %v381, %v439
        %v516 = vadd.f32 %v514, 0.0009
        %v517 = vadd.f32 %v515, 0.0009
        %v518 = vmul.f32 %v512, %v516
        %v519 = vmul.f32 %v513, %v517
        %v520 = vrcp.pop %v518
        %v521 = vrcp.pop %v519
        %v522 = vmul.f32 %v518, %v520
        %v523 = vmul.f32 %v519, %v521
        %v524 = vsub.f32 2.0, %v522
        %v525 = vsub.f32 2.0, %v523
        %v526 = vmul.f32 %v520, %v524
        %v527 = vmul.f32 %v521, %v525
        %v528 = vmul.f32 %v508, %v526
        %v529 = vmul.f32 %v509, %v527
        %v530 = vsub.f32 1.0, %v528
        %v531 = vsub.f32 1.0, %v529
        %v532 = vmul.f32 %v530, 0.5
        %v533 = vmul.f32 %v531, 0.5
        %v534 = vmax.f32 %v532, 0.0
        %v535 = vmax.f32 %v533, 0.0
        %v536 = vmin.f32 %v534, 1.0
        %v537 = vmin.f32 %v535, 1.0
        %vm538 = vcmask 130048
        %539 = vst.msk [vmem:[%s201] sm:$0xff] %vm538, %v536
        %540 = vst.msk [vmem:[%s201 + $0x8] sm:$0xff] %vm538, %v537
        %s541 = sand.u32 %s82, 1
        %s542 = scalar_lea.sflag [#allocation4], %s541
        %s543 = sand.u32 %s82, 1
        %s544 = smul.addr %s543, 16
        %s545 = scalar_lea.vmem [#allocation7], %s544
        // Predicated region
        $region37: #{tpu_custom_call.1} parent=27 // pred_check
          %p546 = pneg %p92
        $region38: #{tpu_custom_call.1} parent=27 // pred_check_branch
          %548 = sbr.rel (%p546) target = $region40
        $region39: #{tpu_custom_call.1} parent=27 // pred_region
          %s550 = ssub.s32 256, 256
          %551 = vsyncadd %s542, %s550
          %s552 = smul.addr %s22, 2
          %s553 = smul.addr %s552, 128
          %s554 = scalar_lea.hbm %s2, %s553
          %s555 = sshll.u32 %s545, 4
          %s556 = int_to_ptr.vmem [resolvable:$true] %s555
          %561 = dma.vmem_to_hbm [thread:$0]  %s556, 256, %s554, %s542, 128, 128, 8
        $region40: #{tpu_custom_call.1} parent=27 // pred_fallthru
          _
      $region28: #{tpu_custom_call.1} parent=5 // pred_fallthru
        _
      %p562 = scmp.le.s32.totalorder 2, %s17
      // Predicated region
      $region41: #{tpu_custom_call.1} parent=5 // pred_check
        %p563 = pneg %p562
      $region42: #{tpu_custom_call.1} parent=5 // pred_check_branch
        %565 = sbr.rel (%p563) target = $region44
      $region43: #{tpu_custom_call.1} parent=5 // pred_region
        %s566 = ssub.s32 %s17, 2
        // Predicated region
        $region45: #{tpu_custom_call.1} parent=43 // pred_check
          %p567 = pneg %p98
        $region46: #{tpu_custom_call.1} parent=43 // pred_check_branch
          %569 = sbr.rel (%p567) target = $region48
        $region47: #{tpu_custom_call.1} parent=43 // pred_region
          %s570 = sand.u32 %s83, 1
          %s571 = scalar_lea.sflag [#allocation4], %s570
          %s572 = sand.u32 %s83, 1
          %s573 = smul.addr %s572, 16
          %s574 = scalar_lea.vmem [#allocation7], %s573
          %575 = dma.done %s571, 256
        $region48: #{tpu_custom_call.1} parent=43 // pred_fallthru
          _
      $region44: #{tpu_custom_call.1} parent=5 // pred_fallthru
        _
    $region6: #{tpu_custom_call.1} parent=1 // loop_footer
      %s21 = sadd.s32 1, %s17
    $region7: #{tpu_custom_call.1} parent=1 // loop_footer_branch
      %16 = sbr.rel target = $region3
    $region8: #{tpu_custom_call.1} parent=1 // loop_exit
      _
    %576 = vsyncpa [#allocation3], 1
    %s577 = scalar_lea.sflag [#allocation3], 1
    %578 = vsyncpa %s577, 1
    %579 = vsyncpa [#allocation6], 1
    %s580 = scalar_lea.sflag [#allocation6], 1
    %581 = vsyncpa %s580, 1
    %582 = vsyncpa [#allocation4], 1
    %s583 = scalar_lea.sflag [#allocation4], 1
    %584 = vsyncpa %s583, 1

</llo_original>
